<compile_context>
chip_gen: v5e
topology: v5e:2x2
jax: 0.10.0
libtpu: 0.0.40
codegen_flags: <defaults>
</compile_context>

<pallas_src>
import functools

import jax
import jax.numpy as jnp
from jax.experimental import pallas as pl
from jax.experimental.pallas import tpu as pltpu


def _embed_rowmajor_kernel(idx_ref, tbl_ref, out_ref):
    """Row-major layout (dim % 128 == 0).

    idx_ref : (TILE_N, 3) int32  fused-table ids (tok, pos+off, fpos+off)
    tbl_ref : (V_PAD, D)  f32    fused embedding table
    out_ref : (TILE_N, D) f32
    """
    tile_n = idx_ref.shape[0]
    v = tbl_ref.shape[0]
    idx = idx_ref[...]                                            # (TILE_N, 3)
    iota = jax.lax.broadcasted_iota(jnp.int32, (tile_n, v), 1)
    # The three id ranges are disjoint in the fused table -> exactly 3 ones/row;
    # the MXU accumulation performs the 3-way embedding sum for free.
    hit = ((iota == idx[:, 0:1]) | (iota == idx[:, 1:2]) | (iota == idx[:, 2:3]))
    onehot = hit.astype(tbl_ref.dtype)                            # (TILE_N, V)
    out_ref[...] = jnp.dot(onehot, tbl_ref[...],
                           preferred_element_type=jnp.float32).astype(out_ref.dtype)


def _embed_colmajor_kernel(idx_ref, tbl_t_ref, out_ref):
    """Transposed layout for dim < 128 / dim not lane-aligned.

    idx_ref   : (3, TILE_N) int32  fused-table ids, lane-dense
    tbl_t_ref : (D, V_PAD)  f32    fused table, pre-transposed in the wrapper
    out_ref   : (D, TILE_N) f32    lane-dense stores (TILE_N multiple of 128)
    """
    tile_n = idx_ref.shape[1]
    v = tbl_t_ref.shape[1]
    idx = idx_ref[...]                                            # (3, TILE_N)
    iota = jax.lax.broadcasted_iota(jnp.int32, (v, tile_n), 0)
    hit = ((iota == idx[0:1, :]) | (iota == idx[1:2, :]) | (iota == idx[2:3, :]))
    onehot = hit.astype(tbl_t_ref.dtype)                          # (V, TILE_N)
    out_ref[...] = jnp.dot(tbl_t_ref[...], onehot,
                           preferred_element_type=jnp.float32).astype(out_ref.dtype)


@functools.partial(jax.jit, static_argnames=("tile_n",))
def flat_embed(tokens, positionals, float_positionals,
               emb_table, pos_emb_table, fpos_emb_table, *, tile_n=1024):
    """Pallas equivalent of FlatEmbedder.embed().

    tokens / positionals / float_positionals : (slen, bs) int32
    emb_table        : (vocab, dim) f32   (row 1 == padding row, zeros)
    pos_emb_table    : (13, dim)    f32
    fpos_emb_table   : (5, dim)     f32
    returns          : (slen, bs, dim) f32
    """
    slen, bs = tokens.shape
    n = slen * bs
    vocab, dim = emb_table.shape
    n_pos = pos_emb_table.shape[0]
    n_fpos = fpos_emb_table.shape[0]

    # ---- fused table: [word ; positional ; float_positional], rows padded to x128
    # NOTE: this one-hot-matmul gather is meant for the small vocabularies of
    # FlatEmbedder; a very large word vocab would want a DMA-gather instead.
    v_total = vocab + n_pos + n_fpos
    v_pad = ((v_total + 127) // 128) * 128
    fused = jnp.concatenate([emb_table, pos_emb_table, fpos_emb_table], axis=0)
    fused = jnp.pad(fused, ((0, v_pad - v_total), (0, 0))).astype(jnp.float32)

    # ---- fused ids (offset pos/fpos into their table sections)
    tok = tokens.reshape(n).astype(jnp.int32)
    pos = positionals.reshape(n).astype(jnp.int32) + vocab
    fpos = float_positionals.reshape(n).astype(jnp.int32) + vocab + n_pos

    # ---- tile sizing: large lane-aligned token tiles; pad n with <PAD> ids
    tile_n = max(128, (tile_n // 128) * 128)
    n_128 = ((n + 127) // 128) * 128
    tile = min(tile_n, n_128)
    n_pad = pl.cdiv(n, tile) * tile
    pad_ids = jnp.array([1, 1 + vocab, 1 + vocab + n_pos], jnp.int32)  # <PAD> rows

    cost = pl.CostEstimate(flops=2 * n_pad * v_pad * dim,
                           transcendentals=0,
                           bytes_accessed=(n_pad * dim + v_pad * dim + 3 * n_pad) * 4)
    cparams = pltpu.CompilerParams(dimension_semantics=("parallel",))
    # TODO(synk): for production-size tables, single-buffer the constant table
    # spec (pipeline_mode=pl.Buffered(1)) to halve its VMEM footprint on v7x.

    if dim % 128 == 0:
        # Row-major: output last dim (dim) is already lane-dense.
        ids = jnp.stack([tok, pos, fpos], axis=-1)                    # (n, 3)
        if n_pad != n:
            ids = jnp.concatenate(
                [ids, jnp.broadcast_to(pad_ids, (n_pad - n, 3))], axis=0)
        out = pl.pallas_call(
            _embed_rowmajor_kernel,
            out_shape=jax.ShapeDtypeStruct((n_pad, dim), jnp.float32),
            grid_spec=pltpu.PrefetchScalarGridSpec(
                num_scalar_prefetch=0,
                grid=(n_pad // tile,),
                in_specs=[pl.BlockSpec((tile, 3), lambda i: (i, 0)),
                          pl.BlockSpec((v_pad, dim), lambda i: (0, 0))],
                out_specs=pl.BlockSpec((tile, dim), lambda i: (i, 0)),
            ),
            compiler_params=cparams,
            cost_estimate=cost,
        )(ids, fused)
        out = out[:n]
    else:
        # Transposed: output last dim is the 128-aligned token tile (lane-dense).
        ids = jnp.stack([tok, pos, fpos], axis=0)                     # (3, n)
        if n_pad != n:
            ids = jnp.concatenate(
                [ids, jnp.broadcast_to(pad_ids[:, None], (3, n_pad - n))], axis=1)
        fused_t = fused.T                                             # (dim, v_pad)
        out_t = pl.pallas_call(
            _embed_colmajor_kernel,
            out_shape=jax.ShapeDtypeStruct((dim, n_pad), jnp.float32),
            grid_spec=pltpu.PrefetchScalarGridSpec(
                num_scalar_prefetch=0,
                grid=(n_pad // tile,),
                in_specs=[pl.BlockSpec((3, tile), lambda i: (0, i)),
                          pl.BlockSpec((dim, v_pad), lambda i: (0, 0))],
                out_specs=pl.BlockSpec((dim, tile), lambda i: (0, i)),
            ),
            compiler_params=cparams,
            cost_estimate=cost,
        )(ids, fused_t)
        out = out_t.T[:n]

    return out.reshape(slen, bs, dim)


def make_embedding_table(key, num_embeddings, dim, padding_idx=1):
    """Deterministic synthetic embedding table; padding row zeroed (padding_idx=1)."""
    tbl = 0.02 * jax.random.normal(key, (num_embeddings, dim), dtype=jnp.float32)
    tbl = tbl.at[padding_idx].set(0.0)
    return tbl


def _run_case(case_key, *, vocab, n_pos, n_fpos, dim, slen, bs, tile_n):
    k_emb, k_pos, k_fpos, k_t, k_p, k_fp = jax.random.split(case_key, 6)
    emb_table = make_embedding_table(k_emb, vocab, dim)
    pos_emb_table = make_embedding_table(k_pos, n_pos, dim)
    fpos_emb_table = make_embedding_table(k_fpos, n_fpos, dim)

    # Synthetic batched ids, mimicking FlatEmbedder.batch():
    # row 0 is <EOS>=0, interior rows are encoded tokens, some trailing <PAD>=1.
    tokens = jax.random.randint(k_t, (slen, bs), 2, vocab, dtype=jnp.int32)
    positionals = jax.random.randint(k_p, (slen, bs), 2, n_pos, dtype=jnp.int32)
    float_pos = jax.random.randint(k_fp, (slen, bs), 2, n_fpos, dtype=jnp.int32)
    tokens = tokens.at[0, :].set(0)
    positionals = positionals.at[0, :].set(0)
    float_pos = float_pos.at[0, :].set(0)
    tokens = tokens.at[-2:, 1].set(1)
    positionals = positionals.at[-2:, 1].set(1)
    float_pos = float_pos.at[-2:, 1].set(1)

    out = flat_embed(tokens, positionals, float_pos,
                     emb_table, pos_emb_table, fpos_emb_table, tile_n=tile_n)
    out = jax.block_until_ready(out)

    # Pure-JAX reference of FlatEmbedder.embed (three lookups + sum).
    ref = (jnp.take(emb_table, tokens, axis=0)
           + jnp.take(pos_emb_table, positionals, axis=0)
           + jnp.take(fpos_emb_table, float_pos, axis=0))
    assert out.shape == (slen, bs, dim)
    assert jnp.allclose(out, ref, atol=1e-5, rtol=1e-5), f"mismatch dim={dim}"


if __name__ == "__main__":
    # Vocab sizes implied by FlatEmbedder: word vocab (demo 32), positional 13,
    # float-positional 5.
    VOCAB, N_POS, N_FPOS = 32, 13, 5
    key = jax.random.PRNGKey(0)
    k1, k2, k3 = jax.random.split(key, 3)

    # dim=32 -> transposed (lane-dense) path, single tile.
    _run_case(k1, vocab=VOCAB, n_pos=N_POS, n_fpos=N_FPOS,
              dim=32, slen=16, bs=2, tile_n=1024)
    # dim=128 -> row-major path (lane-dense output), n not a multiple of 8 -> pad path.
    _run_case(k2, vocab=VOCAB, n_pos=N_POS, n_fpos=N_FPOS,
              dim=128, slen=9, bs=3, tile_n=1024)
    # multi-tile grid (n=320 -> 3 tiles of 128), transposed path.
    _run_case(k3, vocab=VOCAB, n_pos=N_POS, n_fpos=N_FPOS,
              dim=32, slen=80, bs=4, tile_n=128)

    # TODO(synk): CPU-side tokenization (float_tokenizer / word2id / batch padding)
    # is host preprocessing in the original module and is not a kernel candidate.
    print("KERNEL_OK")
</pallas_src>

<mosaic_0001>
module attributes {stable_mosaic.version = 11 : i64} {
  func.func @_embed_colmajor_kernel(%arg0: i32, %arg1: memref<3x128xi32, #tpu.memory_space<vmem>>, %arg2: memref<32x128xf32, #tpu.memory_space<vmem>>, %arg3: memref<32x128xf32, #tpu.memory_space<vmem>>) attributes {dimension_semantics = [#tpu.dimension_semantics<parallel>], iteration_bounds = array<i64: 1>, scalar_prefetch = 0 : i64, scratch_operands = 0 : i64, tpu.core_type = #tpu.core_type<tc>, window_params = [{transform_indices = @transform_0, window_bounds = array<i64: 3, 128>}, {pipeline_mode = #tpu.pipeline_mode<synchronous>, transform_indices = @transform_1, window_bounds = array<i64: 32, 128>}, {transform_indices = @transform_2, window_bounds = array<i64: 32, 128>}]} {
    %c0 = arith.constant 0 : index
    %c0_0 = arith.constant 0 : index
    %0 = vector.load %arg1[%c0, %c0_0] : memref<3x128xi32, #tpu.memory_space<vmem>>, vector<3x128xi32>
    %1 = tpu.iota {dimensions = array<i32: 0>} : vector<128x128xi32>
    %2 = vector.extract_strided_slice %0 {offsets = [0, 0], sizes = [1, 128], strides = [1, 1]} : vector<3x128xi32> to vector<1x128xi32>
    %3 = vector.broadcast %2 : vector<1x128xi32> to vector<128x128xi32>
    %4 = arith.cmpi eq, %1, %3 : vector<128x128xi32>
    %5 = vector.extract_strided_slice %0 {offsets = [1, 0], sizes = [1, 128], strides = [1, 1]} : vector<3x128xi32> to vector<1x128xi32>
    %6 = vector.broadcast %5 : vector<1x128xi32> to vector<128x128xi32>
    %7 = arith.cmpi eq, %1, %6 : vector<128x128xi32>
    %8 = arith.ori %4, %7 : vector<128x128xi1>
    %9 = vector.extract_strided_slice %0 {offsets = [2, 0], sizes = [1, 128], strides = [1, 1]} : vector<3x128xi32> to vector<1x128xi32>
    %10 = vector.broadcast %9 : vector<1x128xi32> to vector<128x128xi32>
    %11 = arith.cmpi eq, %1, %10 : vector<128x128xi32>
    %12 = arith.ori %8, %11 : vector<128x128xi1>
    %13 = arith.extui %12 : vector<128x128xi1> to vector<128x128xi32>
    %14 = arith.sitofp %13 : vector<128x128xi32> to vector<128x128xf32>
    %c0_1 = arith.constant 0 : index
    %c0_2 = arith.constant 0 : index
    %15 = vector.load %arg2[%c0_1, %c0_2] : memref<32x128xf32, #tpu.memory_space<vmem>>, vector<32x128xf32>
    %cst = arith.constant dense<0.000000e+00> : vector<32x128xf32>
    %16 = tpu.matmul %15, %14, %cst {dimension_numbers = #tpu.dot_dimension_numbers<[1], [0], [0], [1], [0, 0, 1, 1], [], []>} : vector<32x128xf32>, vector<128x128xf32>, vector<32x128xf32> -> vector<32x128xf32>
    %c0_3 = arith.constant 0 : index
    %c0_4 = arith.constant 0 : index
    %17 = vector.load %arg3[%c0_3, %c0_4] : memref<32x128xf32, #tpu.memory_space<vmem>>, vector<32x128xf32>
    tpu.vector_store %arg3[%c0_3, %c0_4], %16 {strides = array<i32>} : memref<32x128xf32, #tpu.memory_space<vmem>>, vector<32x128xf32>,
    return
  }
  func.func @transform_0(%arg0: i32) -> (i32, i32) {
    %c0_i32 = arith.constant 0 : i32
    %c0_i32_0 = arith.constant 0 : i32
    return %c0_i32, %arg0 : i32, i32
  }
  func.func @transform_1(%arg0: i32) -> (i32, i32) {
    %c0_i32 = arith.constant 0 : i32
    %c0_i32_0 = arith.constant 0 : i32
    %c0_i32_1 = arith.constant 0 : i32
    return %c0_i32, %c0_i32_0 : i32, i32
  }
  func.func @transform_2(%arg0: i32) -> (i32, i32) {
    %c0_i32 = arith.constant 0 : i32
    %c0_i32_0 = arith.constant 0 : i32
    return %c0_i32, %arg0 : i32, i32
  }
}

</mosaic_0001>

<llo_original>
// kernel: flat_embed.1
$region0: #{flat_embed.1}
  #allocation0 [shape = 'u32[]', space=smem, size = 0x4, offset = 0x4, fixed_abs, tag = 'smem constant byte address 0x4 - core index']
  #allocation1 [shape = 'u32[72,128]{1,0:T(1,128)}', space=vmem, size = 0x9000, scoped, tag = 'internal scratch']
  %s0 = inlined_call_operand.vmem [shape: s32[3,128], index: 0, kind: input, shape index: {}]
  %s1 = inlined_call_operand.vmem [shape: f32[32,128], index: 1, kind: input, shape index: {}]
  %s2 = inlined_call_operand.vmem [shape: f32[32,128], index: 2, kind: output, shape index: {}]
  %s3 = sld [smem:[#allocation0]]
  $region18: #{flat_embed.1} parent=0
    _
  %s5 = ssub.s32 1, %s3
  %s6 = scalar_select 0, %s5, %s3
  // Predicated region
  $region2: #{flat_embed.1} parent=0 // pred_check
    _
  $region3: #{flat_embed.1} parent=0 // pred_check_branch
    %8 = sbr.rel (0) target = $region5
  $region4: #{flat_embed.1} parent=0 // pred_region
    _
  $region5: #{flat_embed.1} parent=0 // pred_fallthru
    _
  // Predicated region
  $region6: #{flat_embed.1} parent=0 // pred_check
    _
  $region7: #{flat_embed.1} parent=0 // pred_check_branch
    %10 = sbr.rel (0) target = $region9
  $region8: #{flat_embed.1} parent=0 // pred_region
    _
  $region9: #{flat_embed.1} parent=0 // pred_fallthru
    _
  %v11 = vld [vmem:[%s0] sm:$0x7]
  %v12 = vlaneseq
  %v13 = vshrl.u32 %v12, 7
  %v14 = vadd.s32 %v13, 8
  %v15 = vadd.s32 %v13, 16
  %v16 = vadd.s32 %v13, 24
  %v17 = vadd.s32 %v13, 32
  %v18 = vadd.s32 %v13, 40
  %v19 = vadd.s32 %v13, 48
  %v20 = vadd.s32 %v13, 56
  %v21 = vadd.s32 %v13, 64
  %v22 = vadd.s32 %v13, 72
  %v23 = vadd.s32 %v13, 80
  %v24 = vadd.s32 %v13, 88
  %v25 = vadd.s32 %v13, 96
  %v26 = vadd.s32 %v13, 104
  %v27 = vadd.s32 %v13, 112
  %v28 = vadd.s32 %v13, 120
  %v29 = vperm.slane %v11, 0
  %vm30 = vcmp.eq.s32.totalorder %v13, %v29
  %vm31 = vcmp.eq.s32.totalorder %v14, %v29
  %vm32 = vcmp.eq.s32.totalorder %v15, %v29
  %vm33 = vcmp.eq.s32.totalorder %v16, %v29
  %vm34 = vcmp.eq.s32.totalorder %v17, %v29
  %vm35 = vcmp.eq.s32.totalorder %v18, %v29
  %vm36 = vcmp.eq.s32.totalorder %v19, %v29
  %vm37 = vcmp.eq.s32.totalorder %v20, %v29
  %vm38 = vcmp.eq.s32.totalorder %v21, %v29
  %vm39 = vcmp.eq.s32.totalorder %v22, %v29
  %vm40 = vcmp.eq.s32.totalorder %v23, %v29
  %vm41 = vcmp.eq.s32.totalorder %v24, %v29
  %vm42 = vcmp.eq.s32.totalorder %v25, %v29
  %vm43 = vcmp.eq.s32.totalorder %v26, %v29
  %vm44 = vcmp.eq.s32.totalorder %v27, %v29
  %vm45 = vcmp.eq.s32.totalorder %v28, %v29
  %v46 = vperm.slane %v11, 1
  %vm47 = vcmp.eq.s32.totalorder %v13, %v46
  %vm48 = vcmp.eq.s32.totalorder %v14, %v46
  %vm49 = vcmp.eq.s32.totalorder %v15, %v46
  %vm50 = vcmp.eq.s32.totalorder %v16, %v46
  %vm51 = vcmp.eq.s32.totalorder %v17, %v46
  %vm52 = vcmp.eq.s32.totalorder %v18, %v46
  %vm53 = vcmp.eq.s32.totalorder %v19, %v46
  %vm54 = vcmp.eq.s32.totalorder %v20, %v46
  %vm55 = vcmp.eq.s32.totalorder %v21, %v46
  %vm56 = vcmp.eq.s32.totalorder %v22, %v46
  %vm57 = vcmp.eq.s32.totalorder %v23, %v46
  %vm58 = vcmp.eq.s32.totalorder %v24, %v46
  %vm59 = vcmp.eq.s32.totalorder %v25, %v46
  %vm60 = vcmp.eq.s32.totalorder %v26, %v46
  %vm61 = vcmp.eq.s32.totalorder %v27, %v46
  %vm62 = vcmp.eq.s32.totalorder %v28, %v46
  %vm63 = vmor %vm30, %vm47
  %vm64 = vmor %vm31, %vm48
  %vm65 = vmor %vm32, %vm49
  %vm66 = vmor %vm33, %vm50
  %vm67 = vmor %vm34, %vm51
  %vm68 = vmor %vm35, %vm52
  %vm69 = vmor %vm36, %vm53
  %vm70 = vmor %vm37, %vm54
  %vm71 = vmor %vm38, %vm55
  %vm72 = vmor %vm39, %vm56
  %vm73 = vmor %vm40, %vm57
  %vm74 = vmor %vm41, %vm58
  %vm75 = vmor %vm42, %vm59
  %vm76 = vmor %vm43, %vm60
  %vm77 = vmor %vm44, %vm61
  %vm78 = vmor %vm45, %vm62
  %v79 = vperm.slane %v11, 2
  %vm80 = vcmp.eq.s32.totalorder %v13, %v79
  %vm81 = vcmp.eq.s32.totalorder %v14, %v79
  %vm82 = vcmp.eq.s32.totalorder %v15, %v79
  %vm83 = vcmp.eq.s32.totalorder %v16, %v79
  %vm84 = vcmp.eq.s32.totalorder %v17, %v79
  %vm85 = vcmp.eq.s32.totalorder %v18, %v79
  %vm86 = vcmp.eq.s32.totalorder %v19, %v79
  %vm87 = vcmp.eq.s32.totalorder %v20, %v79
  %vm88 = vcmp.eq.s32.totalorder %v21, %v79
  %vm89 = vcmp.eq.s32.totalorder %v22, %v79
  %vm90 = vcmp.eq.s32.totalorder %v23, %v79
  %vm91 = vcmp.eq.s32.totalorder %v24, %v79
  %vm92 = vcmp.eq.s32.totalorder %v25, %v79
  %vm93 = vcmp.eq.s32.totalorder %v26, %v79
  %vm94 = vcmp.eq.s32.totalorder %v27, %v79
  %vm95 = vcmp.eq.s32.totalorder %v28, %v79
  %vm96 = vmor %vm63, %vm80
  %vm97 = vmor %vm64, %vm81
  %vm98 = vmor %vm65, %vm82
  %vm99 = vmor %vm66, %vm83
  %vm100 = vmor %vm67, %vm84
  %vm101 = vmor %vm68, %vm85
  %vm102 = vmor %vm69, %vm86
  %vm103 = vmor %vm70, %vm87
  %vm104 = vmor %vm71, %vm88
  %vm105 = vmor %vm72, %vm89
  %vm106 = vmor %vm73, %vm90
  %vm107 = vmor %vm74, %vm91
  %vm108 = vmor %vm75, %vm92
  %vm109 = vmor %vm76, %vm93
  %vm110 = vmor %vm77, %vm94
  %vm111 = vmor %vm78, %vm95
  %v112 = vsel %vm96, 1, 0
  %v113 = vsel %vm97, 1, 0
  %v114 = vsel %vm98, 1, 0
  %v115 = vsel %vm99, 1, 0
  %v116 = vsel %vm100, 1, 0
  %v117 = vsel %vm101, 1, 0
  %v118 = vsel %vm102, 1, 0
  %v119 = vsel %vm103, 1, 0
  %v120 = vsel %vm104, 1, 0
  %v121 = vsel %vm105, 1, 0
  %v122 = vsel %vm106, 1, 0
  %v123 = vsel %vm107, 1, 0
  %v124 = vsel %vm108, 1, 0
  %v125 = vsel %vm109, 1, 0
  %v126 = vsel %vm110, 1, 0
  %v127 = vsel %vm111, 1, 0
  %v128 = vcvt.s32.f32 %v112
  %v129 = vcvt.s32.f32 %v113
  %v130 = vcvt.s32.f32 %v114
  %v131 = vcvt.s32.f32 %v115
  %v132 = vcvt.s32.f32 %v116
  %v133 = vcvt.s32.f32 %v117
  %v134 = vcvt.s32.f32 %v118
  %v135 = vcvt.s32.f32 %v119
  %v136 = vcvt.s32.f32 %v120
  %v137 = vcvt.s32.f32 %v121
  %v138 = vcvt.s32.f32 %v122
  %v139 = vcvt.s32.f32 %v123
  %v140 = vcvt.s32.f32 %v124
  %v141 = vcvt.s32.f32 %v125
  %v142 = vcvt.s32.f32 %v126
  %v143 = vcvt.s32.f32 %v127
  %v144 = vld [vmem:[%s1] sm:$0xff]
  %v145 = vld [vmem:[%s1 + $0x8] sm:$0xff]
  %v146 = vld [vmem:[%s1 + $0x10] sm:$0xff]
  %v147 = vld [vmem:[%s1 + $0x18] sm:$0xff]
  %148 = vmatpush.msra.mxu0 %v143
  %149 = vmatpush.msra.mxu0 %v142
  %150 = vmatpush.msra.mxu0 %v141
  %151 = vmatpush.msra.mxu0 %v140
  %152 = vmatpush.msra.mxu0 %v139
  %153 = vmatpush.msra.mxu0 %v138
  %154 = vmatpush.msra.mxu0 %v137
  %155 = vmatpush.msra.mxu0 %v136
  %156 = vmatpush.msra.mxu0 %v135
  %157 = vmatpush.msra.mxu0 %v134
  %158 = vmatpush.msra.mxu0 %v133
  %159 = vmatpush.msra.mxu0 %v132
  %160 = vmatpush.msra.mxu0 %v131
  %161 = vmatpush.msra.mxu0 %v130
  %162 = vmatpush.msra.mxu0 %v129
  %163 = vmatpush.msra.mxu0 %v128
  %164 = vmatmul.f32.gmra.mxu0 %v144
  %v165 = vpop.f32.mrf.mxu0
  %v166 = vadd.f32 0.0, %v165
  %167 = vmatmul.f32.gmra.mxu0 %v145
  %v168 = vpop.f32.mrf.mxu0
  %v169 = vadd.f32 0.0, %v168
  %170 = vmatmul.f32.gmra.mxu0 %v146
  %v171 = vpop.f32.mrf.mxu0
  %v172 = vadd.f32 0.0, %v171
  %173 = vmatmul.f32.gmra.mxu0 %v147
  %v174 = vpop.f32.mrf.mxu0
  %v175 = vadd.f32 0.0, %v174
  %176 = vdwg.mxu0
  %177 = vst [vmem:[%s2] sm:$0xff] %v166
  %178 = vst [vmem:[%s2 + $0x8] sm:$0xff] %v169
  %179 = vst [vmem:[%s2 + $0x10] sm:$0xff] %v172
  %180 = vst [vmem:[%s2 + $0x18] sm:$0xff] %v175
  // Predicated region
  $region10: #{flat_embed.1} parent=0 // pred_check
    _
  $region11: #{flat_embed.1} parent=0 // pred_check_branch
    %182 = sbr.rel (0) target = $region13
  $region12: #{flat_embed.1} parent=0 // pred_region
    _
  $region13: #{flat_embed.1} parent=0 // pred_fallthru
    _
  // Predicated region
  $region14: #{flat_embed.1} parent=0 // pred_check
    _
  $region15: #{flat_embed.1} parent=0 // pred_check_branch
    %184 = sbr.rel (0) target = $region17
  $region16: #{flat_embed.1} parent=0 // pred_region
    _
  $region17: #{flat_embed.1} parent=0 // pred_fallthru
    _

</llo_original>
